<compile_context>
chip_gen: v6e
topology: v6e:2x2x1
jax: 0.10.0
libtpu: 0.0.40
codegen_flags: <defaults>
</compile_context>

<pallas_src>
import functools

import jax
import jax.numpy as jnp
from jax import lax
from jax.experimental import pallas as pl
from jax.experimental.pallas import tpu as pltpu

BN_EPS = 1e-5
_LANE = 128
_SUBLANE = 8


def _round_up(n, m):
    return (n + m - 1) // m * m


def _pad_dim(a, axis, target):
    if a.shape[axis] == target:
        return a
    pads = [(0, 0)] * a.ndim
    pads[axis] = (0, target - a.shape[axis])
    return jnp.pad(a, pads)


# ---------------------------------------------------------------------------
# Phase 1: Conv1d(k=K, SAME) + bias + ReLU + AdaptiveAvgPool1d(1), one batch
# element per grid step.
# ---------------------------------------------------------------------------
def _conv_pool_kernel(z_ref, wk_ref, bc_ref, o_ref, *, num_taps, valid_len):
    # z_ref : (1, LP, Cin)   zero-padded signal for this batch element
    # wk_ref: (K, Cin, CF)   per-tap conv weights (resident across grid steps)
    # bc_ref: (1, CF)        conv bias (f32)
    # o_ref : (1, 1, CF)     pooled feature row for this batch element
    z = z_ref[0]                                              # (LP, Cin)
    lp = z.shape[0]

    # Conv taps: aligned sublane rolls (XLU) + K small MXU pushes, f32 accumulate.
    # roll by (lp - k) == roll by -k, i.e. row l sees z[l + k]; no unaligned
    # sublane slices, so no hidden VMEM copies of the activation.
    acc = jnp.dot(z, wk_ref[0], preferred_element_type=jnp.float32)
    for k in range(1, num_taps):
        zk = pltpu.roll(z, shift=lp - k, axis=0)
        acc = acc + jnp.dot(zk, wk_ref[k], preferred_element_type=jnp.float32)

    y = jnp.maximum(acc + bc_ref[...], 0.0)                   # bias + ReLU (LP, CF)

    # AdaptiveAvgPool1d(1): masked mean over the L valid rows (rows >= L hold
    # zero-pad / rolled garbage and are excluded by the iota mask).
    row = lax.broadcasted_iota(jnp.int32, y.shape, 0)
    y = jnp.where(row < valid_len, y, 0.0)
    pooled = jnp.sum(y, axis=0, keepdims=True) * (1.0 / valid_len)   # (1, CF)
    o_ref[...] = pooled.reshape(o_ref.shape).astype(o_ref.dtype)


# ---------------------------------------------------------------------------
# Phase 2: MLPHead = Linear -> BatchNorm1d(batch stats) -> ReLU -> Linear.
# Grid-less on purpose: BN statistics are over the FULL batch.
# ---------------------------------------------------------------------------
def _head_kernel(f_ref, w1_ref, b1_ref, g_ref, bt_ref, w2_ref, b2_ref, o_ref):
    feat = f_ref[...]                                         # (B, CF)
    h = jnp.dot(feat, w1_ref[...], preferred_element_type=jnp.float32) + b1_ref[...]
    mu = jnp.mean(h, axis=0, keepdims=True)                   # training-mode stats
    var = jnp.mean((h - mu) ** 2, axis=0, keepdims=True)      # biased variance
    hn = (h - mu) * lax.rsqrt(var + BN_EPS) * g_ref[...] + bt_ref[...]
    hn = jnp.maximum(hn, 0.0)                                 # ReLU
    o_ref[...] = (jnp.dot(hn.astype(w2_ref.dtype), w2_ref[...],
                          preferred_element_type=jnp.float32)
                  + b2_ref[...]).astype(o_ref.dtype)


# ---------------------------------------------------------------------------
# One-time parameter prep (hoisted out of the forward path, review item #9).
# ---------------------------------------------------------------------------
def prepare_moco_params(params, dot_dtype=jnp.float32):
    conv_w = params["conv_w"]                    # (Cout, Cin, K)
    conv_b = params["conv_b"]                    # (Cout,)
    Cout, _, K = conv_w.shape
    hidden = params["w1"].shape[1]
    proj = params["w2"].shape[1]
    CF = _round_up(Cout, _LANE)
    HID = _round_up(hidden, _LANE)
    PRJ = _round_up(proj, _LANE)

    # Per-tap conv weights (K, Cin, CF); padded output channels are zero.
    wk = jnp.stack([conv_w[:, :, k].T for k in range(K)], axis=0)
    wk = _pad_dim(wk, 2, CF).astype(dot_dtype)
    bc = _pad_dim(conv_b.reshape(1, Cout).astype(jnp.float32), 1, CF)

    # MLP head parameters, lane-padded (zero pads keep dead lanes exactly zero).
    w1 = _pad_dim(_pad_dim(params["w1"], 0, CF), 1, HID).astype(dot_dtype)
    b1 = _pad_dim(params["b1"].reshape(1, hidden).astype(jnp.float32), 1, HID)
    g = _pad_dim(params["gamma"].reshape(1, hidden).astype(jnp.float32), 1, HID)
    bt = _pad_dim(params["beta"].reshape(1, hidden).astype(jnp.float32), 1, HID)
    w2 = _pad_dim(_pad_dim(params["w2"], 0, HID), 1, PRJ).astype(dot_dtype)
    b2 = _pad_dim(params["b2"].reshape(1, proj).astype(jnp.float32), 1, PRJ)
    return dict(wk=wk, bc=bc, w1=w1, b1=b1, gamma=g, beta=bt, w2=w2, b2=b2)


# ---------------------------------------------------------------------------
# Forward pass wrapper (per-call work: input pad/transpose + 2 pallas_calls).
# ---------------------------------------------------------------------------
def moco_backbone_forward(x, prep, *, proj):
    """x: (B, Cin, L) float32 in PyTorch NCL layout; prep: prepare_moco_params()."""
    B, Cin, L = x.shape
    K, _, CF = prep["wk"].shape
    HID = prep["w1"].shape[1]
    PRJ = prep["w2"].shape[1]
    dot_dtype = prep["wk"].dtype
    itemsize = jnp.dtype(dot_dtype).itemsize

    pad = K // 2
    LP = _round_up(L + 2 * pad, _SUBLANE)        # sublane-aligned padded length

    # Per-call input prep only: SAME left pad + zero tail up to LP, channels last.
    xp = jnp.pad(x, ((0, 0), (0, 0), (pad, LP - L - pad)))    # (B, Cin, LP)
    z = xp.transpose(0, 2, 1).astype(dot_dtype)               # (B, LP, Cin)

    conv_cost = pl.CostEstimate(
        flops=int(2 * B * K * LP * Cin * CF),
        transcendentals=0,
        bytes_accessed=int(B * LP * Cin * itemsize + K * Cin * CF * itemsize
                           + CF * 4 + B * CF * itemsize))

    # Phase 1: grid over B ("parallel"), resident weights, lane-dense output rows.
    feat = pl.pallas_call(
        functools.partial(_conv_pool_kernel, num_taps=K, valid_len=L),
        out_shape=jax.ShapeDtypeStruct((B, 1, CF), dot_dtype),
        grid_spec=pltpu.PrefetchScalarGridSpec(
            num_scalar_prefetch=0,
            grid=(B,),
            in_specs=[
                pl.BlockSpec((1, LP, Cin), lambda b: (b, 0, 0)),   # pipelined tile
                pl.BlockSpec((K, Cin, CF), lambda b: (0, 0, 0)),   # resident weights
                pl.BlockSpec((1, CF), lambda b: (0, 0)),           # resident bias
            ],
            out_specs=pl.BlockSpec((1, 1, CF), lambda b: (b, 0, 0)),
        ),
        compiler_params=pltpu.CompilerParams(
            dimension_semantics=("parallel",),
            # Usage here is tiny; at scale size the batch tile so it stays well
            # under v7x's 64 MiB physical VMEM (128 MiB on v5e/v6e).
            vmem_limit_bytes=32 * 1024 * 1024),
        cost_estimate=conv_cost,
    )(z, prep["wk"], prep["bc"])

    feat = feat.reshape(B, CF)                   # (B, CF) pooled features

    head_cost = pl.CostEstimate(
        flops=int(2 * B * CF * HID + 2 * B * HID * PRJ + 10 * B * HID),
        transcendentals=int(HID),
        bytes_accessed=int(B * CF * itemsize + CF * HID * itemsize
                           + HID * PRJ * itemsize + 4 * HID * 4 + PRJ * 4
                           + B * PRJ * 4))

    # Phase 2: BatchNorm needs full-batch statistics -> single grid-less call.
    vmem = pl.BlockSpec(memory_space=pltpu.MemorySpace.VMEM)
    out = pl.pallas_call(
        _head_kernel,
        out_shape=jax.ShapeDtypeStruct((B, PRJ), jnp.float32),
        in_specs=[vmem] * 7,
        out_specs=vmem,
        compiler_params=pltpu.CompilerParams(vmem_limit_bytes=32 * 1024 * 1024),
        cost_estimate=head_cost,
    )(feat, prep["w1"], prep["b1"], prep["gamma"], prep["beta"],
      prep["w2"], prep["b2"])

    return out[:, :proj]


# ---------------------------------------------------------------------------
# Pure-JAX reference (for correctness check)
# ---------------------------------------------------------------------------
def _reference(x, params):
    y = lax.conv_general_dilated(
        x, params["conv_w"], window_strides=(1,), padding="SAME",
        dimension_numbers=("NCH", "OIH", "NCH"))
    y = jnp.maximum(y + params["conv_b"][None, :, None], 0.0)
    f = jnp.mean(y, axis=-1)                                  # pool + squeeze(-1)
    h = f @ params["w1"] + params["b1"]
    mu = jnp.mean(h, axis=0, keepdims=True)
    var = jnp.mean((h - mu) ** 2, axis=0, keepdims=True)
    hn = (h - mu) / jnp.sqrt(var + BN_EPS) * params["gamma"] + params["beta"]
    hn = jnp.maximum(hn, 0.0)
    return hn @ params["w2"] + params["b2"]


# ---------------------------------------------------------------------------
# Main
# ---------------------------------------------------------------------------
if __name__ == "__main__":
    # Small shapes consistent with the module:
    B, Cin, L = 2, 4, 16            # signal input (NCL)
    feat_ch = 32                    # backbone output channels == MLPHead in_channels
    hidden = 64                     # mlp_hidden_size
    proj = 16                       # projection_size
    K = 3

    key = jax.random.PRNGKey(0)
    ks = jax.random.split(key, 8)
    params = {
        "conv_w": 0.1 * jax.random.normal(ks[0], (feat_ch, Cin, K), jnp.float32),
        "conv_b": 0.1 * jax.random.normal(ks[1], (feat_ch,), jnp.float32),
        "w1":     0.1 * jax.random.normal(ks[2], (feat_ch, hidden), jnp.float32),
        "b1":     0.1 * jax.random.normal(ks[3], (hidden,), jnp.float32),
        "gamma":  jnp.ones((hidden,), jnp.float32),
        "beta":   jnp.zeros((hidden,), jnp.float32),
        "w2":     0.1 * jax.random.normal(ks[4], (hidden, proj), jnp.float32),
        "b2":     0.1 * jax.random.normal(ks[5], (proj,), jnp.float32),
    }
    x = jax.random.normal(ks[6], (B, Cin, L), jnp.float32)

    # Parameter padding / re-layout is hoisted out of the per-call path.
    prep = prepare_moco_params(params)          # dot_dtype=jnp.bfloat16 at scale

    fwd = jax.jit(moco_backbone_forward, static_argnames=("proj",))
    out = jax.block_until_ready(fwd(x, prep, proj=proj))
    ref = jax.block_until_ready(_reference(x, params))

    assert out.shape == (B, proj)
    assert jnp.allclose(out, ref, atol=1e-4, rtol=1e-4), \
        float(jnp.max(jnp.abs(out - ref)))
    print("KERNEL_OK")
</pallas_src>

<mosaic_0001>
module attributes {stable_mosaic.version = 11 : i64} {
  func.func @_conv_pool_kernel(%arg0: i32, %arg1: memref<1x24x4xf32, #tpu.memory_space<vmem>>, %arg2: memref<3x4x128xf32, #tpu.memory_space<vmem>>, %arg3: memref<1x128xf32, #tpu.memory_space<vmem>>, %arg4: memref<1x1x128xf32, #tpu.memory_space<vmem>>) attributes {dimension_semantics = [#tpu.dimension_semantics<parallel>], iteration_bounds = array<i64: 2>, scalar_prefetch = 0 : i64, scratch_operands = 0 : i64, tpu.core_type = #tpu.core_type<tc>, window_params = [{transform_indices = @transform_0, window_bounds = array<i64: 1, 24, 4>}, {pipeline_mode = #tpu.pipeline_mode<synchronous>, transform_indices = @transform_1, window_bounds = array<i64: 3, 4, 128>}, {pipeline_mode = #tpu.pipeline_mode<synchronous>, transform_indices = @transform_2, window_bounds = array<i64: 1, 128>}, {transform_indices = @transform_3, window_bounds = array<i64: 1, 1, 128>}]} {
    %c0 = arith.constant 0 : index
    %c0_0 = arith.constant 0 : index
    %c0_1 = arith.constant 0 : index
    %0 = vector.load %arg1[%c0, %c0_0, %c0_1] : memref<1x24x4xf32, #tpu.memory_space<vmem>>, vector<1x24x4xf32>
    %1 = vector.shape_cast %0 : vector<1x24x4xf32> to vector<24x4xf32>
    %c0_2 = arith.constant 0 : index
    %c0_3 = arith.constant 0 : index
    %c0_4 = arith.constant 0 : index
    %2 = vector.load %arg2[%c0_2, %c0_3, %c0_4] : memref<3x4x128xf32, #tpu.memory_space<vmem>>, vector<1x4x128xf32>
    %3 = vector.shape_cast %2 : vector<1x4x128xf32> to vector<4x128xf32>
    %cst = arith.constant dense<0.000000e+00> : vector<24x128xf32>
    %4 = tpu.matmul %1, %3, %cst {dimension_numbers = #tpu.dot_dimension_numbers<[1], [0], [0], [1], [0, 0, 1, 1], [], []>} : vector<24x4xf32>, vector<4x128xf32>, vector<24x128xf32> -> vector<24x128xf32>
    %c23_i32 = arith.constant 23 : i32
    %5 = tpu.dynamic_rotate %1 by %c23_i32 dim 0 : vector<24x4xf32>, i32 -> vector<24x4xf32>
    %c1 = arith.constant 1 : index
    %c0_5 = arith.constant 0 : index
    %c0_6 = arith.constant 0 : index
    %6 = vector.load %arg2[%c1, %c0_5, %c0_6] : memref<3x4x128xf32, #tpu.memory_space<vmem>>, vector<1x4x128xf32>
    %7 = vector.shape_cast %6 : vector<1x4x128xf32> to vector<4x128xf32>
    %cst_7 = arith.constant dense<0.000000e+00> : vector<24x128xf32>
    %8 = tpu.matmul %5, %7, %cst_7 {dimension_numbers = #tpu.dot_dimension_numbers<[1], [0], [0], [1], [0, 0, 1, 1], [], []>} : vector<24x4xf32>, vector<4x128xf32>, vector<24x128xf32> -> vector<24x128xf32>
    %9 = arith.addf %4, %8 : vector<24x128xf32>
    %c22_i32 = arith.constant 22 : i32
    %10 = tpu.dynamic_rotate %1 by %c22_i32 dim 0 : vector<24x4xf32>, i32 -> vector<24x4xf32>
    %c2 = arith.constant 2 : index
    %c0_8 = arith.constant 0 : index
    %c0_9 = arith.constant 0 : index
    %11 = vector.load %arg2[%c2, %c0_8, %c0_9] : memref<3x4x128xf32, #tpu.memory_space<vmem>>, vector<1x4x128xf32>
    %12 = vector.shape_cast %11 : vector<1x4x128xf32> to vector<4x128xf32>
    %cst_10 = arith.constant dense<0.000000e+00> : vector<24x128xf32>
    %13 = tpu.matmul %10, %12, %cst_10 {dimension_numbers = #tpu.dot_dimension_numbers<[1], [0], [0], [1], [0, 0, 1, 1], [], []>} : vector<24x4xf32>, vector<4x128xf32>, vector<24x128xf32> -> vector<24x128xf32>
    %14 = arith.addf %9, %13 : vector<24x128xf32>
    %c0_11 = arith.constant 0 : index
    %c0_12 = arith.constant 0 : index
    %15 = vector.load %arg3[%c0_11, %c0_12] : memref<1x128xf32, #tpu.memory_space<vmem>>, vector<1x128xf32>
    %16 = vector.broadcast %15 : vector<1x128xf32> to vector<24x128xf32>
    %17 = arith.addf %14, %16 : vector<24x128xf32>
    %cst_13 = arith.constant 0.000000e+00 : f32
    %18 = vector.broadcast %cst_13 : f32 to vector<24x128xf32>
    %19 = arith.maximumf %17, %18 : vector<24x128xf32>
    %20 = tpu.iota {dimensions = array<i32: 0>} : vector<24x128xi32>
    %c16_i32 = arith.constant 16 : i32
    %21 = vector.broadcast %c16_i32 : i32 to vector<24x128xi32>
    %22 = arith.cmpi slt, %20, %21 : vector<24x128xi32>
    %cst_14 = arith.constant 0.000000e+00 : f32
    %23 = vector.broadcast %cst_14 : f32 to vector<24x128xf32>
    %24 = arith.select %22, %19, %23 : vector<24x128xi1>, vector<24x128xf32>
    %cst_15 = arith.constant dense<0.000000e+00> : vector<128xf32>
    %25 = vector.multi_reduction <add>, %24, %cst_15 [0] : vector<24x128xf32> to vector<128xf32>
    %26 = vector.shape_cast %25 : vector<128xf32> to vector<1x128xf32>
    %cst_16 = arith.constant 6.250000e-02 : f32
    %27 = vector.broadcast %cst_16 : f32 to vector<1x128xf32>
    %28 = arith.mulf %26, %27 : vector<1x128xf32>
    %29 = vector.shape_cast %28 : vector<1x128xf32> to vector<1x1x128xf32>
    %c0_17 = arith.constant 0 : index
    %c0_18 = arith.constant 0 : index
    %c0_19 = arith.constant 0 : index
    %30 = vector.load %arg4[%c0_17, %c0_18, %c0_19] : memref<1x1x128xf32, #tpu.memory_space<vmem>>, vector<1x1x128xf32>
    tpu.vector_store %arg4[%c0_17, %c0_18, %c0_19], %29 {strides = array<i32>} : memref<1x1x128xf32, #tpu.memory_space<vmem>>, vector<1x1x128xf32>,
    return
  }
  func.func @transform_0(%arg0: i32) -> (i32, i32, i32) {
    %c0_i32 = arith.constant 0 : i32
    %c0_i32_0 = arith.constant 0 : i32
    %c0_i32_1 = arith.constant 0 : i32
    return %arg0, %c0_i32, %c0_i32_0 : i32, i32, i32
  }
  func.func @transform_1(%arg0: i32) -> (i32, i32, i32) {
    %c0_i32 = arith.constant 0 : i32
    %c0_i32_0 = arith.constant 0 : i32
    %c0_i32_1 = arith.constant 0 : i32
    %c0_i32_2 = arith.constant 0 : i32
    return %c0_i32, %c0_i32_0, %c0_i32_1 : i32, i32, i32
  }
  func.func @transform_2(%arg0: i32) -> (i32, i32) {
    %c0_i32 = arith.constant 0 : i32
    %c0_i32_0 = arith.constant 0 : i32
    %c0_i32_1 = arith.constant 0 : i32
    return %c0_i32, %c0_i32_0 : i32, i32
  }
  func.func @transform_3(%arg0: i32) -> (i32, i32, i32) {
    %c0_i32 = arith.constant 0 : i32
    %c0_i32_0 = arith.constant 0 : i32
    %c0_i32_1 = arith.constant 0 : i32
    return %arg0, %c0_i32, %c0_i32_0 : i32, i32, i32
  }
}

module attributes {stable_mosaic.version = 11 : i64} {
  func.func @_head_kernel(%arg0: memref<2x128xf32, #tpu.memory_space<vmem>>, %arg1: memref<128x128xf32, #tpu.memory_space<vmem>>, %arg2: memref<1x128xf32, #tpu.memory_space<vmem>>, %arg3: memref<1x128xf32, #tpu.memory_space<vmem>>, %arg4: memref<1x128xf32, #tpu.memory_space<vmem>>, %arg5: memref<128x128xf32, #tpu.memory_space<vmem>>, %arg6: memref<1x128xf32, #tpu.memory_space<vmem>>, %arg7: memref<2x128xf32, #tpu.memory_space<vmem>>) attributes {dimension_semantics = [], scalar_prefetch = 0 : i64, scratch_operands = 0 : i64, tpu.core_type = #tpu.core_type<tc>} {
    %c0 = arith.constant 0 : index
    %c0_0 = arith.constant 0 : index
    %0 = vector.load %arg0[%c0, %c0_0] : memref<2x128xf32, #tpu.memory_space<vmem>>, vector<2x128xf32>
    %c0_1 = arith.constant 0 : index
    %c0_2 = arith.constant 0 : index
    %1 = vector.load %arg1[%c0_1, %c0_2] : memref<128x128xf32, #tpu.memory_space<vmem>>, vector<128x128xf32>
    %cst = arith.constant dense<0.000000e+00> : vector<2x128xf32>
    %2 = tpu.matmul %0, %1, %cst {dimension_numbers = #tpu.dot_dimension_numbers<[1], [0], [0], [1], [0, 0, 1, 1], [], []>} : vector<2x128xf32>, vector<128x128xf32>, vector<2x128xf32> -> vector<2x128xf32>
    %c0_3 = arith.constant 0 : index
    %c0_4 = arith.constant 0 : index
    %3 = vector.load %arg2[%c0_3, %c0_4] : memref<1x128xf32, #tpu.memory_space<vmem>>, vector<1x128xf32>
    %4 = vector.broadcast %3 : vector<1x128xf32> to vector<2x128xf32>
    %5 = arith.addf %2, %4 : vector<2x128xf32>
    %cst_5 = arith.constant dense<0.000000e+00> : vector<128xf32>
    %6 = vector.multi_reduction <add>, %5, %cst_5 [0] : vector<2x128xf32> to vector<128xf32>
    %7 = vector.shape_cast %6 : vector<128xf32> to vector<1x128xf32>
    %cst_6 = arith.constant 2.000000e+00 : f32
    %8 = vector.broadcast %cst_6 : f32 to vector<1x128xf32>
    %9 = arith.divf %7, %8 : vector<1x128xf32>
    %10 = vector.broadcast %9 : vector<1x128xf32> to vector<2x128xf32>
    %11 = arith.subf %5, %10 : vector<2x128xf32>
    %12 = arith.mulf %11, %11 : vector<2x128xf32>
    %cst_7 = arith.constant dense<0.000000e+00> : vector<128xf32>
    %13 = vector.multi_reduction <add>, %12, %cst_7 [0] : vector<2x128xf32> to vector<128xf32>
    %14 = vector.shape_cast %13 : vector<128xf32> to vector<1x128xf32>
    %cst_8 = arith.constant 2.000000e+00 : f32
    %15 = vector.broadcast %cst_8 : f32 to vector<1x128xf32>
    %16 = arith.divf %14, %15 : vector<1x128xf32>
    %17 = vector.broadcast %9 : vector<1x128xf32> to vector<2x128xf32>
    %18 = arith.subf %5, %17 : vector<2x128xf32>
    %cst_9 = arith.constant 9.99999974E-6 : f32
    %19 = vector.broadcast %cst_9 : f32 to vector<1x128xf32>
    %20 = arith.addf %16, %19 : vector<1x128xf32>
    %21 = math.rsqrt %20 : vector<1x128xf32>
    %22 = vector.broadcast %21 : vector<1x128xf32> to vector<2x128xf32>
    %23 = arith.mulf %18, %22 : vector<2x128xf32>
    %c0_10 = arith.constant 0 : index
    %c0_11 = arith.constant 0 : index
    %24 = vector.load %arg3[%c0_10, %c0_11] : memref<1x128xf32, #tpu.memory_space<vmem>>, vector<1x128xf32>
    %25 = vector.broadcast %24 : vector<1x128xf32> to vector<2x128xf32>
    %26 = arith.mulf %23, %25 : vector<2x128xf32>
    %c0_12 = arith.constant 0 : index
    %c0_13 = arith.constant 0 : index
    %27 = vector.load %arg4[%c0_12, %c0_13] : memref<1x128xf32, #tpu.memory_space<vmem>>, vector<1x128xf32>
    %28 = vector.broadcast %27 : vector<1x128xf32> to vector<2x128xf32>
    %29 = arith.addf %26, %28 : vector<2x128xf32>
    %cst_14 = arith.constant 0.000000e+00 : f32
    %30 = vector.broadcast %cst_14 : f32 to vector<2x128xf32>
    %31 = arith.maximumf %29, %30 : vector<2x128xf32>
    %c0_15 = arith.constant 0 : index
    %c0_16 = arith.constant 0 : index
    %32 = vector.load %arg5[%c0_15, %c0_16] : memref<128x128xf32, #tpu.memory_space<vmem>>, vector<128x128xf32>
    %cst_17 = arith.constant dense<0.000000e+00> : vector<2x128xf32>
    %33 = tpu.matmul %31, %32, %cst_17 {dimension_numbers = #tpu.dot_dimension_numbers<[1], [0], [0], [1], [0, 0, 1, 1], [], []>} : vector<2x128xf32>, vector<128x128xf32>, vector<2x128xf32> -> vector<2x128xf32>
    %c0_18 = arith.constant 0 : index
    %c0_19 = arith.constant 0 : index
    %34 = vector.load %arg6[%c0_18, %c0_19] : memref<1x128xf32, #tpu.memory_space<vmem>>, vector<1x128xf32>
    %35 = vector.broadcast %34 : vector<1x128xf32> to vector<2x128xf32>
    %36 = arith.addf %33, %35 : vector<2x128xf32>
    %c0_20 = arith.constant 0 : index
    %c0_21 = arith.constant 0 : index
    %37 = vector.load %arg7[%c0_20, %c0_21] : memref<2x128xf32, #tpu.memory_space<vmem>>, vector<2x128xf32>
    tpu.vector_store %arg7[%c0_20, %c0_21], %36 {strides = array<i32>} : memref<2x128xf32, #tpu.memory_space<vmem>>, vector<2x128xf32>,
    return
  }
}

</mosaic_0001>

<llo_original>
// kernel: moco_backbone_forward.3
$region0: #{moco_backbone_forward.3}
  #allocation0 [shape = 'u32[]', space=smem, size = 0x4, offset = 0x4, fixed_abs, tag = 'smem constant byte address 0x4 - core index']
  #allocation1 [shape = 'u32[144,128]{1,0:T(1,128)}', space=vmem, size = 0x12000, scoped, tag = 'internal scratch']
  %s0 = inlined_call_operand.vmem [shape: f32[2,128], index: 0, kind: input, shape index: {}]
  %s1 = inlined_call_operand.vmem [shape: f32[128,128], index: 1, kind: input, shape index: {}]
  %s2 = inlined_call_operand.vmem [shape: f32[1,128], index: 2, kind: input, shape index: {}]
  %s3 = inlined_call_operand.vmem [shape: f32[1,128], index: 3, kind: input, shape index: {}]
  %s4 = inlined_call_operand.vmem [shape: f32[1,128], index: 4, kind: input, shape index: {}]
  %s5 = inlined_call_operand.hbm [shape: f32[128,128], index: 5, kind: input, shape index: {}]
  %s6 = inlined_call_operand.vmem [shape: f32[1,128], index: 6, kind: input, shape index: {}]
  %s7 = inlined_call_operand.hbm [shape: f32[2,128], index: 7, kind: output, shape index: {}]
  %s8 = sld [smem:[#allocation0]]
  $region42: #{moco_backbone_forward.3} parent=0
    _
  %s10 = ssub.s32 1, %s8
  %s11 = scalar_select 0, %s10, %s8
  $region1: #{moco_backbone_forward.3} parent=0
    #allocation2 [shape = 'u8[65536]{0}', space=vmem, size = 0x10000, scoped, tag = 'input window, operand 5, single buffered']
    #allocation3 [shape = 's32[1]{0}', space=sflag, size = 0x4, scoped, tag = 'scoped memory for moco_backbone_forward.3']
    #allocation4 [shape = 's32[1]{0}', space=sflag, size = 0x4, scoped, tag = 'scoped memory for moco_backbone_forward.3']
    #allocation5 [shape = 'u8[1024]{0}', space=vmem, size = 0x400, scoped, tag = 'output window, operand 0, single buffered']
    %12 = vsyncpa [#allocation3], 0
    %13 = vsyncpa [#allocation4], 0
    // Predicated region
    $region2: #{moco_backbone_forward.3} parent=1 // pred_check
      _
    $region3: #{moco_backbone_forward.3} parent=1 // pred_check_branch
      %15 = sbr.rel (0) target = $region5
    $region4: #{moco_backbone_forward.3} parent=1 // pred_region
      _
    $region5: #{moco_backbone_forward.3} parent=1 // pred_fallthru
      _
    // Predicated region
    $region6: #{moco_backbone_forward.3} parent=1 // pred_check
      _
    $region7: #{moco_backbone_forward.3} parent=1 // pred_check_branch
      %17 = sbr.rel (0) target = $region9
    $region8: #{moco_backbone_forward.3} parent=1 // pred_region
      _
    $region9: #{moco_backbone_forward.3} parent=1 // pred_fallthru
      _
    // Predicated region
    $region10: #{moco_backbone_forward.3} parent=1 // pred_check
      _
    $region11: #{moco_backbone_forward.3} parent=1 // pred_check_branch
      %19 = sbr.rel (0) target = $region13
    $region12: #{moco_backbone_forward.3} parent=1 // pred_region
      _
    $region13: #{moco_backbone_forward.3} parent=1 // pred_fallthru
      _
    // Predicated region
    $region14: #{moco_backbone_forward.3} parent=1 // pred_check
      _
    $region15: #{moco_backbone_forward.3} parent=1 // pred_check_branch
      %21 = sbr.rel (0) target = $region17
    $region16: #{moco_backbone_forward.3} parent=1 // pred_region
      _
    $region17: #{moco_backbone_forward.3} parent=1 // pred_fallthru
      _
    // Predicated region
    $region18: #{moco_backbone_forward.3} parent=1 // pred_check
      _
    $region19: #{moco_backbone_forward.3} parent=1 // pred_check_branch
      %23 = sbr.rel (0) target = $region21
    $region20: #{moco_backbone_forward.3} parent=1 // pred_region
      _
    $region21: #{moco_backbone_forward.3} parent=1 // pred_fallthru
      _
    // Predicated region
    $region22: #{moco_backbone_forward.3} parent=1 // pred_check
      _
    $region23: #{moco_backbone_forward.3} parent=1 // pred_check_branch
      %25 = sbr.rel (0) target = $region25
    $region24: #{moco_backbone_forward.3} parent=1 // pred_region
      %s27 = ssub.s32 2048, 2048
      %28 = vsyncadd [#allocation3], %s27
      %s29 = sshll.u32 [#allocation2], 4
      %s30 = int_to_ptr.vmem [resolvable:$true] %s29
      %35 = dma.hbm_to_vmem [thread:$0]  %s5, 2048, %s30, [#allocation3], 128, 128, 8
    $region25: #{moco_backbone_forward.3} parent=1 // pred_fallthru
      _
    // Predicated region
    $region26: #{moco_backbone_forward.3} parent=1 // pred_check
      _
    $region27: #{moco_backbone_forward.3} parent=1 // pred_check_branch
      %37 = sbr.rel (0) target = $region29
    $region28: #{moco_backbone_forward.3} parent=1 // pred_region
      _
    $region29: #{moco_backbone_forward.3} parent=1 // pred_fallthru
      _
    // Predicated region
    $region30: #{moco_backbone_forward.3} parent=1 // pred_check
      _
    $region31: #{moco_backbone_forward.3} parent=1 // pred_check_branch
      %39 = sbr.rel (0) target = $region33
    $region32: #{moco_backbone_forward.3} parent=1 // pred_region
      %40 = dma.done [#allocation3], 2048
    $region33: #{moco_backbone_forward.3} parent=1 // pred_fallthru
      _
    %v41 = vld [vmem:[%s0] sm:$0x3]
    %v42 = vld [vmem:[%s1] sm:$0xff]
    %v43 = vld [vmem:[%s1 + $0x8] sm:$0xff]
    %v44 = vld [vmem:[%s1 + $0x10] sm:$0xff]
    %v45 = vld [vmem:[%s1 + $0x18] sm:$0xff]
    %v46 = vld [vmem:[%s1 + $0x20] sm:$0xff]
    %v47 = vld [vmem:[%s1 + $0x28] sm:$0xff]
    %v48 = vld [vmem:[%s1 + $0x30] sm:$0xff]
    %v49 = vld [vmem:[%s1 + $0x38] sm:$0xff]
    %v50 = vld [vmem:[%s1 + $0x40] sm:$0xff]
    %v51 = vld [vmem:[%s1 + $0x48] sm:$0xff]
    %v52 = vld [vmem:[%s1 + $0x50] sm:$0xff]
    %v53 = vld [vmem:[%s1 + $0x58] sm:$0xff]
    %v54 = vld [vmem:[%s1 + $0x60] sm:$0xff]
    %v55 = vld [vmem:[%s1 + $0x68] sm:$0xff]
    %v56 = vld [vmem:[%s1 + $0x70] sm:$0xff]
    %v57 = vld [vmem:[%s1 + $0x78] sm:$0xff]
    %v58 = vld [vmem:[%s2] sm:$0x1]
    %v60 = vlaneseq
    %v61 = vshrl.u32 %v60, 7
    %v62 = vsub.s32 0, %v61
    %v63 = vrot.slane %v58, %v62
    %65 = vmatprep.subr.mxu0 0.0
    %66 = vmatpush1.msra.mxu0 %v57
    %67 = vmatprep.subr.mxu0 0.0
    %68 = vmatpush1.msra.mxu0 %v56
    %69 = vmatprep.subr.mxu0 0.0
    %70 = vmatpush1.msra.mxu0 %v55
    %71 = vmatprep.subr.mxu0 0.0
    %72 = vmatpush1.msra.mxu0 %v54
    %73 = vmatprep.subr.mxu0 0.0
    %74 = vmatpush1.msra.mxu0 %v53
    %75 = vmatprep.subr.mxu0 0.0
    %76 = vmatpush1.msra.mxu0 %v52
    %77 = vmatprep.subr.mxu0 0.0
    %78 = vmatpush1.msra.mxu0 %v51
    %79 = vmatprep.subr.mxu0 0.0
    %80 = vmatpush1.msra.mxu0 %v50
    %81 = vmatprep.subr.mxu0 0.0
    %82 = vmatpush1.msra.mxu0 %v49
    %83 = vmatprep.subr.mxu0 0.0
    %84 = vmatpush1.msra.mxu0 %v48
    %85 = vmatprep.subr.mxu0 0.0
    %86 = vmatpush1.msra.mxu0 %v47
    %87 = vmatprep.subr.mxu0 0.0
    %88 = vmatpush1.msra.mxu0 %v46
    %89 = vmatprep.subr.mxu0 0.0
    %90 = vmatpush1.msra.mxu0 %v45
    %91 = vmatprep.subr.mxu0 0.0
    %92 = vmatpush1.msra.mxu0 %v44
    %93 = vmatprep.subr.mxu0 0.0
    %94 = vmatpush1.msra.mxu0 %v43
    %95 = vmatprep.subr.mxu0 0.0
    %96 = vmatpush1.msra.mxu0 %v42
    %97 = vmatprep.subr.mxu0 0.0
    %98 = vmatpush2.msra.mxu0 0.0
    %99 = vmatprep.subr.mxu0 0.0
    %100 = vmatpush2.msra.mxu0 0.0
    %101 = vmatprep.subr.mxu0 0.0
    %102 = vmatpush2.msra.mxu0 0.0
    %103 = vmatprep.subr.mxu0 0.0
    %104 = vmatpush2.msra.mxu0 0.0
    %105 = vmatprep.subr.mxu0 0.0
    %106 = vmatpush2.msra.mxu0 0.0
    %107 = vmatprep.subr.mxu0 0.0
    %108 = vmatpush2.msra.mxu0 0.0
    %109 = vmatprep.subr.mxu0 0.0
    %110 = vmatpush2.msra.mxu0 0.0
    %111 = vmatprep.subr.mxu0 0.0
    %112 = vmatpush2.msra.mxu0 0.0
    %113 = vmatprep.subr.mxu0 0.0
    %114 = vmatpush2.msra.mxu0 0.0
    %115 = vmatprep.subr.mxu0 0.0
    %116 = vmatpush2.msra.mxu0 0.0
    %117 = vmatprep.subr.mxu0 0.0
    %118 = vmatpush2.msra.mxu0 0.0
    %119 = vmatprep.subr.mxu0 0.0
    %120 = vmatpush2.msra.mxu0 0.0
    %121 = vmatprep.subr.mxu0 0.0
    %122 = vmatpush2.msra.mxu0 0.0
    %123 = vmatprep.subr.mxu0 0.0
    %124 = vmatpush2.msra.mxu0 0.0
    %125 = vmatprep.subr.mxu0 0.0
    %126 = vmatpush2.msra.mxu0 0.0
    %127 = vmatprep.subr.mxu0 0.0
    %128 = vmatpush2.msra.mxu0 0.0
    %129 = vmatprep.mubr.f32.mxu0 0.0
    %130 = vmatmul.mubr.f32.gmra.mxu0 %v41
    %v131 = vpop.f32.mrf.mxu0
    %v132 = vadd.f32 %v63, %v131
    %v133 = vpop.f32.mrf.mxu0
    %134 = vdwg.mxu0
    %vm135 = vcmask 1041408
    %v136 = vsel %vm135, %v132, 0.0
    %v137 = vrot.slane %v136, 4
    %v138 = vadd.f32 %v136, %v137
    %v139 = vrot.slane %v138, 2
    %v140 = vadd.f32 %v138, %v139
    %v141 = vrot.slane %v140, 1
    %v142 = vadd.f32 %v140, %v141
    %v143 = vrcp.pop 2.0
    %v144 = vmul.f32 %v142, %v143
    %v145 = vsub.f32 %v132, %v144
    %v146 = vmul.f32 %v145, %v145
    %v147 = vsel %vm135, %v146, 0.0
    %v148 = vrot.slane %v147, 4
    %v149 = vadd.f32 %v147, %v148
    %v150 = vrot.slane %v149, 2
    %v151 = vadd.f32 %v149, %v150
    %v152 = vrot.slane %v151, 1
    %v153 = vadd.f32 %v151, %v152
    %v154 = vmul.f32 %v153, %v143
    %v155 = vadd.f32 %v154, 1e-05
    %v156 = vrsqrt.pop %v155
    %v157 = vmul.f32 %v145, %v156
    %v158 = vld [vmem:[%s3] sm:$0x1]
    %v160 = vlaneseq
    %v161 = vshrl.u32 %v160, 7
    %v162 = vsub.s32 0, %v161
    %v163 = vrot.slane %v158, %v162
    %v165 = vmul.f32 %v157, %v163
    %v166 = vld [vmem:[%s4] sm:$0x1]
    %v168 = vlaneseq
    %v169 = vshrl.u32 %v168, 7
    %v170 = vsub.s32 0, %v169
    %v171 = vrot.slane %v166, %v170
    %v173 = vadd.f32 %v165, %v171
    %v174 = vmax.f32 %v173, 0.0
    %v175 = vld [vmem:[#allocation2] sm:$0xff]
    %v176 = vld [vmem:[#allocation2 + $0x8] sm:$0xff]
    %v177 = vld [vmem:[#allocation2 + $0x10] sm:$0xff]
    %v178 = vld [vmem:[#allocation2 + $0x18] sm:$0xff]
    %v179 = vld [vmem:[#allocation2 + $0x20] sm:$0xff]
    %v180 = vld [vmem:[#allocation2 + $0x28] sm:$0xff]
    %v181 = vld [vmem:[#allocation2 + $0x30] sm:$0xff]
    %v182 = vld [vmem:[#allocation2 + $0x38] sm:$0xff]
    %v183 = vld [vmem:[#allocation2 + $0x40] sm:$0xff]
    %v184 = vld [vmem:[#allocation2 + $0x48] sm:$0xff]
    %v185 = vld [vmem:[#allocation2 + $0x50] sm:$0xff]
    %v186 = vld [vmem:[#allocation2 + $0x58] sm:$0xff]
    %v187 = vld [vmem:[#allocation2 + $0x60] sm:$0xff]
    %v188 = vld [vmem:[#allocation2 + $0x68] sm:$0xff]
    %v189 = vld [vmem:[#allocation2 + $0x70] sm:$0xff]
    %v190 = vld [vmem:[#allocation2 + $0x78] sm:$0xff]
    %v191 = vld [vmem:[%s6] sm:$0x1]
    %v193 = vlaneseq
    %v194 = vshrl.u32 %v193, 7
    %v195 = vsub.s32 0, %v194
    %v196 = vrot.slane %v191, %v195
    %198 = vmatprep.subr.mxu0 0.0
    %199 = vmatpush1.msra.mxu0 %v190
    %200 = vmatprep.subr.mxu0 0.0
    %201 = vmatpush1.msra.mxu0 %v189
    %202 = vmatprep.subr.mxu0 0.0
    %203 = vmatpush1.msra.mxu0 %v188
    %204 = vmatprep.subr.mxu0 0.0
    %205 = vmatpush1.msra.mxu0 %v187
    %206 = vmatprep.subr.mxu0 0.0
    %207 = vmatpush1.msra.mxu0 %v186
    %208 = vmatprep.subr.mxu0 0.0
    %209 = vmatpush1.msra.mxu0 %v185
    %210 = vmatprep.subr.mxu0 0.0
    %211 = vmatpush1.msra.mxu0 %v184
    %212 = vmatprep.subr.mxu0 0.0
    %213 = vmatpush1.msra.mxu0 %v183
    %214 = vmatprep.subr.mxu0 0.0
    %215 = vmatpush1.msra.mxu0 %v182
    %216 = vmatprep.subr.mxu0 0.0
    %217 = vmatpush1.msra.mxu0 %v181
    %218 = vmatprep.subr.mxu0 0.0
    %219 = vmatpush1.msra.mxu0 %v180
    %220 = vmatprep.subr.mxu0 0.0
    %221 = vmatpush1.msra.mxu0 %v179
    %222 = vmatprep.subr.mxu0 0.0
    %223 = vmatpush1.msra.mxu0 %v178
    %224 = vmatprep.subr.mxu0 0.0
    %225 = vmatpush1.msra.mxu0 %v177
    %226 = vmatprep.subr.mxu0 0.0
    %227 = vmatpush1.msra.mxu0 %v176
    %228 = vmatprep.subr.mxu0 0.0
    %229 = vmatpush1.msra.mxu0 %v175
    %230 = vmatprep.subr.mxu0 0.0
    %231 = vmatpush2.msra.mxu0 0.0
    %232 = vmatprep.subr.mxu0 0.0
    %233 = vmatpush2.msra.mxu0 0.0
    %234 = vmatprep.subr.mxu0 0.0
    %235 = vmatpush2.msra.mxu0 0.0
    %236 = vmatprep.subr.mxu0 0.0
    %237 = vmatpush2.msra.mxu0 0.0
    %238 = vmatprep.subr.mxu0 0.0
    %239 = vmatpush2.msra.mxu0 0.0
    %240 = vmatprep.subr.mxu0 0.0
    %241 = vmatpush2.msra.mxu0 0.0
    %242 = vmatprep.subr.mxu0 0.0
    %243 = vmatpush2.msra.mxu0 0.0
    %244 = vmatprep.subr.mxu0 0.0
    %245 = vmatpush2.msra.mxu0 0.0
    %246 = vmatprep.subr.mxu0 0.0
    %247 = vmatpush2.msra.mxu0 0.0
    %248 = vmatprep.subr.mxu0 0.0
    %249 = vmatpush2.msra.mxu0 0.0
    %250 = vmatprep.subr.mxu0 0.0
    %251 = vmatpush2.msra.mxu0 0.0
    %252 = vmatprep.subr.mxu0 0.0
    %253 = vmatpush2.msra.mxu0 0.0
    %254 = vmatprep.subr.mxu0 0.0
    %255 = vmatpush2.msra.mxu0 0.0
    %256 = vmatprep.subr.mxu0 0.0
    %257 = vmatpush2.msra.mxu0 0.0
    %258 = vmatprep.subr.mxu0 0.0
    %259 = vmatpush2.msra.mxu0 0.0
    %260 = vmatprep.subr.mxu0 0.0
    %261 = vmatpush2.msra.mxu0 0.0
    %262 = vmatprep.mubr.f32.mxu0 0.0
    %263 = vmatmul.mubr.f32.gmra.mxu0 %v174
    %v264 = vpop.f32.mrf.mxu0
    %v265 = vadd.f32 %v196, %v264
    %v266 = vpop.f32.mrf.mxu0
    %267 = vdwg.mxu0
    %268 = vst [vmem:[#allocation5] sm:$0x3] %v265
    // Predicated region
    $region34: #{moco_backbone_forward.3} parent=1 // pred_check
      _
    $region35: #{moco_backbone_forward.3} parent=1 // pred_check_branch
      %270 = sbr.rel (0) target = $region37
    $region36: #{moco_backbone_forward.3} parent=1 // pred_region
      %s272 = ssub.s32 32, 32
      %273 = vsyncadd [#allocation4], %s272
      %s275 = sshll.u32 [#allocation5], 4
      %s276 = int_to_ptr.vmem [resolvable:$true] %s275
      %278 = dma.vmem_to_hbm [thread:$0]  %s276, 32, %s7, [#allocation4]
    $region37: #{moco_backbone_forward.3} parent=1 // pred_fallthru
      _
    // Predicated region
    $region38: #{moco_backbone_forward.3} parent=1 // pred_check
      _
    $region39: #{moco_backbone_forward.3} parent=1 // pred_check_branch
      %280 = sbr.rel (0) target = $region41
    $region40: #{moco_backbone_forward.3} parent=1 // pred_region
      %281 = dma.done [#allocation4], 32
    $region41: #{moco_backbone_forward.3} parent=1 // pred_fallthru
      _
    %282 = vsyncpa [#allocation3], 1
    %283 = vsyncpa [#allocation4], 1

// kernel: moco_backbone_forward.2
$region0: #{moco_backbone_forward.2}
  #allocation0 [shape = 'u32[]', space=smem, size = 0x4, offset = 0x4, fixed_abs, tag = 'smem constant byte address 0x4 - core index']
  #allocation1 [shape = 'u32[144,128]{1,0:T(1,128)}', space=vmem, size = 0x12000, scoped, tag = 'internal scratch']
  %s0 = inlined_call_operand.vmem [shape: f32[2,24,4], index: 0, kind: input, shape index: {}]
  %s1 = inlined_call_operand.vmem [shape: f32[3,4,128], index: 1, kind: input, shape index: {}]
  %s2 = inlined_call_operand.hbm [shape: f32[1,128], index: 2, kind: input, shape index: {}]
  %s3 = inlined_call_operand.vmem [shape: f32[2,1,128], index: 3, kind: output, shape index: {}]
  %s4 = sld [smem:[#allocation0]]
  $region49: #{moco_backbone_forward.2} parent=0
    _
  %s6 = ssub.s32 1, %s4
  %s7 = scalar_select 0, %s6, %s4
  $region1: #{moco_backbone_forward.2} parent=0
    #allocation2 [shape = 'u8[512]{0}', space=vmem, size = 0x400, scoped, tag = 'input window, operand 2, single buffered']
    #allocation3 [shape = 's32[2]{0}', space=sflag, size = 0x8, scoped, tag = 'scoped memory for moco_backbone_forward.2']
    %8 = vsyncpa [#allocation3], 0
    loop: start=0, step=1, limit=4
    $region2: #{moco_backbone_forward.2} parent=1 // loop_pre_header
      _
    $region3: #{moco_backbone_forward.2} parent=1 // loop_header
      %s10 = sphi 0, %s14
      %p11 = scmp.ge.s32.totalorder %s10, 4
      %s20 = sphi 0, %s22
      %s23 = sphi 0, %s20
      %s24 = sphi 0, %s23
      %s40 = sphi 0, %s24
      %s44 = sphi 0, %s44
      %s46 = sphi 0, %s44
      %s47 = sphi 0, %s46
      %s61 = sphi 0, %s47
      %s65 = sphi 0, %s65
      %s67 = sphi 0, %s65
      %s68 = sphi 0, %s67
      %s82 = sphi 0, %s68
      %s88 = sphi 0, %s90
      %s91 = sphi 0, %s88
      %s92 = sphi 0, %s91
      %s108 = sphi 0, %s92
    $region4: #{moco_backbone_forward.2} parent=1 // loop_header_branch
      %13 = sbr.rel (%p11) target = $region8
    $region5: #{moco_backbone_forward.2} parent=1 // loop_body
      %s15 = ssub.s32 %s10, 1
      %s16 = ssub.s32 %s10, 2
      %s17 = sadd.s32 %s10, 1
      %s18 = ssub.s32 %s10, %s17
      %p19 = scmp.eq.s32.totalorder %s18, 0
      %s21 = sadd.s32 %s20, 1
      %s22 = scalar_select %p19, %s20, %s21
      %p25 = pneg %p19
      %p26 = scmp.eq.s32.totalorder %s10, 1
      %p27 = por %p25, %p26
      %p28 = scmp.ne.s32.totalorder %s20, %s23
      %p29 = scmp.eq.s32.totalorder %s10, 0
      %p30 = por %p28, %p29
      %p31 = scmp.ne.s32.totalorder %s20, %s23
      %p32 = scmp.eq.s32.totalorder %s15, 1
      %p33 = por %p31, %p32
      %p34 = scmp.ne.s32.totalorder %s23, %s24
      %p35 = scmp.eq.s32.totalorder %s15, 0
      %p36 = por %p34, %p35
      %p37 = scmp.ne.s32.totalorder %s23, %s24
      %p38 = scmp.eq.s32.totalorder %s16, 1
      %p39 = por %p37, %p38
      %p41 = scmp.ne.s32.totalorder %s24, %s40
      %p42 = scmp.eq.s32.totalorder %s16, 0
      %p43 = por %p41, %p42
      %s45 = sadd.s32 %s44, 1
      %p48 = scmp.eq.s32.totalorder %s10, 1
      %p49 = scmp.ne.s32.totalorder %s44, %s46
      %p50 = scmp.eq.s32.totalorder %s10, 0
      %p51 = por %p49, %p50
      %p52 = scmp.ne.s32.totalorder %s44, %s46
      %p53 = scmp.eq.s32.totalorder %s15, 1
      %p54 = por %p52, %p53
      %p55 = scmp.ne.s32.totalorder %s46, %s47
      %p56 = scmp.eq.s32.totalorder %s15, 0
      %p57 = por %p55, %p56
      %p58 = scmp.ne.s32.totalorder %s46, %s47
      %p59 = scmp.eq.s32.totalorder %s16, 1
      %p60 = por %p58, %p59
      %p62 = scmp.ne.s32.totalorder %s47, %s61
      %p63 = scmp.eq.s32.totalorder %s16, 0
      %p64 = por %p62, %p63
      %s66 = sadd.s32 %s65, 1
      %p69 = scmp.eq.s32.totalorder %s10, 1
      %p70 = scmp.ne.s32.totalorder %s65, %s67
      %p71 = scmp.eq.s32.totalorder %s10, 0
      %p72 = por %p70, %p71
      %p73 = scmp.ne.s32.totalorder %s65, %s67
      %p74 = scmp.eq.s32.totalorder %s15, 1
      %p75 = por %p73, %p74
      %p76 = scmp.ne.s32.totalorder %s67, %s68
      %p77 = scmp.eq.s32.totalorder %s15, 0
      %p78 = por %p76, %p77
      %p79 = scmp.ne.s32.totalorder %s67, %s68
      %p80 = scmp.eq.s32.totalorder %s16, 1
      %p81 = por %p79, %p80
      %p83 = scmp.ne.s32.totalorder %s68, %s82
      %p84 = scmp.eq.s32.totalorder %s16, 0
      %p85 = por %p83, %p84
      %s86 = ssub.s32 %s10, %s17
      %p87 = scmp.eq.s32.totalorder %s86, 0
      %s89 = sadd.s32 %s88, 1
      %s90 = scalar_select %p87, %s88, %s89
      %p93 = pneg %p87
      %p94 = scmp.eq.s32.totalorder %s10, 1
      %p95 = por %p93, %p94
      %p96 = scmp.ne.s32.totalorder %s88, %s91
      %p97 = scmp.eq.s32.totalorder %s10, 0
      %p98 = por %p96, %p97
      %p99 = scmp.ne.s32.totalorder %s88, %s91
      %p100 = scmp.eq.s32.totalorder %s15, 1
      %p101 = por %p99, %p100
      %p102 = scmp.ne.s32.totalorder %s91, %s92
      %p103 = scmp.eq.s32.totalorder %s15, 0
      %p104 = por %p102, %p103
      %p105 = scmp.ne.s32.totalorder %s91, %s92
      %p106 = scmp.eq.s32.totalorder %s16, 1
      %p107 = por %p105, %p106
      %p109 = scmp.ne.s32.totalorder %s92, %s108
      %p110 = scmp.eq.s32.totalorder %s16, 0
      %p111 = por %p109, %p110
      %p112 = scmp.le.s32.totalorder 1, %s10
      %p113 = scmp.lt.s32.totalorder %s10, 3
      %p114 = pnand %p112, %p113
      %p115 = pneg %p114
      // Predicated region
      $region9: #{moco_backbone_forward.2} parent=5 // pred_check
        _
      $region10: #{moco_backbone_forward.2} parent=5 // pred_check_branch
        %117 = sbr.rel (%p114) target = $region12
      $region11: #{moco_backbone_forward.2} parent=5 // pred_region
        %s118 = ssub.s32 %s10, 1
        // Predicated region
        $region13: #{moco_backbone_forward.2} parent=11 // pred_check
          %p119 = pneg %p57
        $region14: #{moco_backbone_forward.2} parent=11 // pred_check_branch
          %121 = sbr.rel (%p119) target = $region16
        $region15: #{moco_backbone_forward.2} parent=11 // pred_region
          _
        $region16: #{moco_backbone_forward.2} parent=11 // pred_fallthru
          _
        // Predicated region
        $region17: #{moco_backbone_forward.2} parent=11 // pred_check
          %p122 = pneg %p78
        $region18: #{moco_backbone_forward.2} parent=11 // pred_check_branch
          %124 = sbr.rel (%p122) target = $region20
        $region19: #{moco_backbone_forward.2} parent=11 // pred_region
          %s126 = ssub.s32 16, 16
          %127 = vsyncadd [#allocation3], %s126
          %s129 = sshll.u32 [#allocation2], 4
          %s130 = int_to_ptr.vmem [resolvable:$true] %s129
          %132 = dma.hbm_to_vmem [thread:$0]  %s2, 16, %s130, [#allocation3]
        $region20: #{moco_backbone_forward.2} parent=11 // pred_fallthru
          _
      $region12: #{moco_backbone_forward.2} parent=5 // pred_fallthru
        _
      %p133 = scmp.lt.s32.totalorder %s10, 2
      // Predicated region
      $region21: #{moco_backbone_forward.2} parent=5 // pred_check
        %p134 = pneg %p133
      $region22: #{moco_backbone_forward.2} parent=5 // pred_check_branch
        %136 = sbr.rel (%p134) target = $region24
      $region23: #{moco_backbone_forward.2} parent=5 // pred_region
        // Predicated region
        $region25: #{moco_backbone_forward.2} parent=23 // pred_check
          %p137 = pneg %p30
        $region26: #{moco_backbone_forward.2} parent=23 // pred_check_branch
          %139 = sbr.rel (%p137) target = $region28
        $region27: #{moco_backbone_forward.2} parent=23 // pred_region
          %p140 = scmp.lt.s32.totalorder %s10, 1
          %s141 = scalar_select %p140, %s10, 1
          %s142 = smul.addr %s141, 3
          %s143 = smul.addr %s142, 8
          %s144 = scalar_lea.vmem %s0, %s143
        $region28: #{moco_backbone_forward.2} parent=23 // pred_fallthru
          _
      $region24: #{moco_backbone_forward.2} parent=5 // pred_fallthru
        _
      %p145 = scmp.le.s32.totalorder 1, %s10
      %p146 = scmp.lt.s32.totalorder %s10, 3
      %p147 = pnand %p145, %p146
      %p148 = pneg %p147
      // Predicated region
      $region29: #{moco_backbone_forward.2} parent=5 // pred_check
        _
      $region30: #{moco_backbone_forward.2} parent=5 // pred_check_branch
        %150 = sbr.rel (%p147) target = $region32
      $region31: #{moco_backbone_forward.2} parent=5 // pred_region
        %s151 = ssub.s32 %s10, 1
        // Predicated region
        $region33: #{moco_backbone_forward.2} parent=31 // pred_check
          %p152 = pneg %p78
        $region34: #{moco_backbone_forward.2} parent=31 // pred_check_branch
          %154 = sbr.rel (%p152) target = $region36
        $region35: #{moco_backbone_forward.2} parent=31 // pred_region
          %155 = dma.done [#allocation3], 16
        $region36: #{moco_backbone_forward.2} parent=31 // pred_fallthru
          _
        %p156 = scmp.lt.s32.totalorder %s15, 1
        %s157 = scalar_select %p156, %s15, 1
        %s158 = smul.addr %s157, 3
        %s159 = smul.addr %s158, 8
        %s160 = scalar_lea.vmem %s0, %s159
        %p161 = pneg %p36
        %p162 = pneg %p33
        %p163 = pneg %p57
        %p164 = pneg %p54
        %p165 = pneg %p78
        %p166 = pneg %p75
        %p167 = pneg %p104
        %p168 = pneg %p101
        %p169 = scmp.lt.s32.totalorder %s15, 1
        %s170 = scalar_select %p169, %s15, 1
        %s171 = scalar_lea.vmem %s3, %s170
        %p172 = scmp.lt.s32.totalorder %s15, 1
        %s173 = scalar_select %p172, %s15, 1
        %s174 = smul.addr %s173, 3
        %s175 = smul.addr %s174, 8
        %s176 = scalar_lea.vmem %s0, %s175
        %p177 = scmp.lt.s32.totalorder %s15, 1
        %s178 = scalar_select %p177, %s15, 1
        %s179 = scalar_lea.vmem %s3, %s178
        %v180 = vld [vmem:[%s176] sm:$0xff]
        %v181 = vld [vmem:[%s176 + $0x8] sm:$0xff]
        %v182 = vld [vmem:[%s176 + $0x10] sm:$0xff]
        %v183 = vld [vmem:[%s1] sm:$0xf]
        %v184 = vrot.slane %v180, 1
        %v185 = vrot.slane %v181, 1
        %v186 = vrot.slane %v182, 1
        %v187 = vlaneseq
        %v188 = vshrl.u32 %v187, 7
        %vm189 = vcmp.lt.s32.totalorder %v188, 7
        %v190 = vsel %vm189, %v185, %v186
        %v191 = vsel %vm189, %v184, %v185
        %v192 = vsel %vm189, %v186, %v184
        %s193 = scalar_lea.vmem %s1, 4
        %v194 = vld [vmem:[%s193] sm:$0xf]
        %vm195 = vcmask 31744
        %v197 = vsel %vm195, %v191, 0
        %v200 = vsel %vm195, %v190, 0
        %v203 = vsel %vm195, %v192, 0
        %vm205 = vcmask 1043456
        %v207 = vsel %vm205, %v194, 0
        %209 = vmatprep.subr.mxu0 0.0
        %210 = vmatpush1.msra.mxu0 0.0
        %211 = vmatprep.subr.mxu0 0.0
        %212 = vmatpush1.msra.mxu0 0.0
        %213 = vmatprep.subr.mxu0 0.0
        %214 = vmatpush1.msra.mxu0 0.0
        %215 = vmatprep.subr.mxu0 0.0
        %216 = vmatpush1.msra.mxu0 0.0
        %217 = vmatprep.subr.mxu0 0.0
        %218 = vmatpush1.msra.mxu0 0.0
        %219 = vmatprep.subr.mxu0 0.0
        %220 = vmatpush1.msra.mxu0 0.0
        %221 = vmatprep.subr.mxu0 0.0
        %222 = vmatpush1.msra.mxu0 0.0
        %223 = vmatprep.subr.mxu0 0.0
        %224 = vmatpush1.msra.mxu0 0.0
        %225 = vmatprep.subr.mxu0 0.0
        %226 = vmatpush1.msra.mxu0 0.0
        %227 = vmatprep.subr.mxu0 0.0
        %228 = vmatpush1.msra.mxu0 0.0
        %229 = vmatprep.subr.mxu0 0.0
        %230 = vmatpush1.msra.mxu0 0.0
        %231 = vmatprep.subr.mxu0 0.0
        %232 = vmatpush1.msra.mxu0 0.0
        %233 = vmatprep.subr.mxu0 0.0
        %234 = vmatpush1.msra.mxu0 0.0
        %235 = vmatprep.subr.mxu0 0.0
        %236 = vmatpush1.msra.mxu0 0.0
        %237 = vmatprep.subr.mxu0 0.0
        %238 = vmatpush1.msra.mxu0 0.0
        %239 = vmatprep.subr.mxu0 0.0
        %240 = vmatpush1.msra.mxu0 %v207
        %241 = vmatprep.subr.mxu0 0.0
        %242 = vmatpush2.msra.mxu0 0.0
        %243 = vmatprep.subr.mxu0 0.0
        %244 = vmatpush2.msra.mxu0 0.0
        %245 = vmatprep.subr.mxu0 0.0
        %246 = vmatpush2.msra.mxu0 0.0
        %247 = vmatprep.subr.mxu0 0.0
        %248 = vmatpush2.msra.mxu0 0.0
        %249 = vmatprep.subr.mxu0 0.0
        %250 = vmatpush2.msra.mxu0 0.0
        %251 = vmatprep.subr.mxu0 0.0
        %252 = vmatpush2.msra.mxu0 0.0
        %253 = vmatprep.subr.mxu0 0.0
        %254 = vmatpush2.msra.mxu0 0.0
        %255 = vmatprep.subr.mxu0 0.0
        %256 = vmatpush2.msra.mxu0 0.0
        %257 = vmatprep.subr.mxu0 0.0
        %258 = vmatpush2.msra.mxu0 0.0
        %259 = vmatprep.subr.mxu0 0.0
        %260 = vmatpush2.msra.mxu0 0.0
        %261 = vmatprep.subr.mxu0 0.0
        %262 = vmatpush2.msra.mxu0 0.0
        %263 = vmatprep.subr.mxu0 0.0
        %264 = vmatpush2.msra.mxu0 0.0
        %265 = vmatprep.subr.mxu0 0.0
        %266 = vmatpush2.msra.mxu0 0.0
        %267 = vmatprep.subr.mxu0 0.0
        %268 = vmatpush2.msra.mxu0 0.0
        %269 = vmatprep.subr.mxu0 0.0
        %270 = vmatpush2.msra.mxu0 0.0
        %271 = vmatprep.subr.mxu0 0.0
        %272 = vmatpush2.msra.mxu0 0.0
        %273 = vmatprep.mubr.f32.mxu0 0.0
        %274 = vmatmul.mubr.f32.gmra.mxu0 %v197
        %v275 = vpop.f32.mrf.mxu0
        %v276 = vadd.f32 0.0, %v275
        %v277 = vpop.f32.mrf.mxu0
        %278 = vmatprep.mubr.f32.mxu0 0.0
        %279 = vmatmul.mubr.f32.gmra.mxu0 %v200
        %v280 = vpop.f32.mrf.mxu0
        %v281 = vadd.f32 0.0, %v280
        %v282 = vpop.f32.mrf.mxu0
        %283 = vmatprep.mubr.f32.mxu0 0.0
        %284 = vmatmul.mubr.f32.gmra.mxu0 %v203
        %v285 = vpop.f32.mrf.mxu0
        %v286 = vadd.f32 0.0, %v285
        %v287 = vpop.f32.mrf.mxu0
        %288 = vdwg.mxu0
        %v290 = vsel %vm195, %v180, 0
        %v293 = vsel %vm195, %v181, 0
        %v296 = vsel %vm195, %v182, 0
        %v299 = vsel %vm205, %v183, 0
        %301 = vmatprep.subr.mxu0 0.0
        %302 = vmatpush1.msra.mxu0 0.0
        %303 = vmatprep.subr.mxu0 0.0
        %304 = vmatpush1.msra.mxu0 0.0
        %305 = vmatprep.subr.mxu0 0.0
        %306 = vmatpush1.msra.mxu0 0.0
        %307 = vmatprep.subr.mxu0 0.0
        %308 = vmatpush1.msra.mxu0 0.0
        %309 = vmatprep.subr.mxu0 0.0
        %310 = vmatpush1.msra.mxu0 0.0
        %311 = vmatprep.subr.mxu0 0.0
        %312 = vmatpush1.msra.mxu0 0.0
        %313 = vmatprep.subr.mxu0 0.0
        %314 = vmatpush1.msra.mxu0 0.0
        %315 = vmatprep.subr.mxu0 0.0
        %316 = vmatpush1.msra.mxu0 0.0
        %317 = vmatprep.subr.mxu0 0.0
        %318 = vmatpush1.msra.mxu0 0.0
        %319 = vmatprep.subr.mxu0 0.0
        %320 = vmatpush1.msra.mxu0 0.0
        %321 = vmatprep.subr.mxu0 0.0
        %322 = vmatpush1.msra.mxu0 0.0
        %323 = vmatprep.subr.mxu0 0.0
        %324 = vmatpush1.msra.mxu0 0.0
        %325 = vmatprep.subr.mxu0 0.0
        %326 = vmatpush1.msra.mxu0 0.0
        %327 = vmatprep.subr.mxu0 0.0
        %328 = vmatpush1.msra.mxu0 0.0
        %329 = vmatprep.subr.mxu0 0.0
        %330 = vmatpush1.msra.mxu0 0.0
        %331 = vmatprep.subr.mxu0 0.0
        %332 = vmatpush1.msra.mxu0 %v299
        %333 = vmatprep.subr.mxu0 0.0
        %334 = vmatpush2.msra.mxu0 0.0
        %335 = vmatprep.subr.mxu0 0.0
        %336 = vmatpush2.msra.mxu0 0.0
        %337 = vmatprep.subr.mxu0 0.0
        %338 = vmatpush2.msra.mxu0 0.0
        %339 = vmatprep.subr.mxu0 0.0
        %340 = vmatpush2.msra.mxu0 0.0
        %341 = vmatprep.subr.mxu0 0.0
        %342 = vmatpush2.msra.mxu0 0.0
        %343 = vmatprep.subr.mxu0 0.0
        %344 = vmatpush2.msra.mxu0 0.0
        %345 = vmatprep.subr.mxu0 0.0
        %346 = vmatpush2.msra.mxu0 0.0
        %347 = vmatprep.subr.mxu0 0.0
        %348 = vmatpush2.msra.mxu0 0.0
        %349 = vmatprep.subr.mxu0 0.0
        %350 = vmatpush2.msra.mxu0 0.0
        %351 = vmatprep.subr.mxu0 0.0
        %352 = vmatpush2.msra.mxu0 0.0
        %353 = vmatprep.subr.mxu0 0.0
        %354 = vmatpush2.msra.mxu0 0.0
        %355 = vmatprep.subr.mxu0 0.0
        %356 = vmatpush2.msra.mxu0 0.0
        %357 = vmatprep.subr.mxu0 0.0
        %358 = vmatpush2.msra.mxu0 0.0
        %359 = vmatprep.subr.mxu0 0.0
        %360 = vmatpush2.msra.mxu0 0.0
        %361 = vmatprep.subr.mxu0 0.0
        %362 = vmatpush2.msra.mxu0 0.0
        %363 = vmatprep.subr.mxu0 0.0
        %364 = vmatpush2.msra.mxu0 0.0
        %365 = vmatprep.mubr.f32.mxu0 0.0
        %366 = vmatmul.mubr.f32.gmra.mxu0 %v290
        %v367 = vpop.f32.mrf.mxu0
        %v368 = vadd.f32 %v276, %v367
        %v369 = vpop.f32.mrf.mxu0
        %370 = vmatprep.mubr.f32.mxu0 0.0
        %371 = vmatmul.mubr.f32.gmra.mxu0 %v293
        %v372 = vpop.f32.mrf.mxu0
        %v373 = vadd.f32 %v281, %v372
        %v374 = vpop.f32.mrf.mxu0
        %375 = vmatprep.mubr.f32.mxu0 0.0
        %376 = vmatmul.mubr.f32.gmra.mxu0 %v296
        %v377 = vpop.f32.mrf.mxu0
        %v378 = vadd.f32 %v286, %v377
        %v379 = vpop.f32.mrf.mxu0
        %380 = vdwg.mxu0
        %v381 = vrot.slane %v180, 2
        %v382 = vrot.slane %v181, 2
        %v383 = vrot.slane %v182, 2
        %vm384 = vcmp.lt.s32.totalorder %v188, 6
        %v385 = vsel %vm384, %v382, %v383
        %v386 = vsel %vm384, %v381, %v382
        %v387 = vsel %vm384, %v383, %v381
        %s388 = scalar_lea.vmem %s1, 8
        %v389 = vld [vmem:[%s388] sm:$0xf]
        %v391 = vsel %vm195, %v386, 0
        %v394 = vsel %vm195, %v385, 0
        %v397 = vsel %vm195, %v387, 0
        %v400 = vsel %vm205, %v389, 0
        %402 = vmatprep.subr.mxu0 0.0
        %403 = vmatpush1.msra.mxu0 0.0
        %404 = vmatprep.subr.mxu0 0.0
        %405 = vmatpush1.msra.mxu0 0.0
        %406 = vmatprep.subr.mxu0 0.0
        %407 = vmatpush1.msra.mxu0 0.0
        %408 = vmatprep.subr.mxu0 0.0
        %409 = vmatpush1.msra.mxu0 0.0
        %410 = vmatprep.subr.mxu0 0.0
        %411 = vmatpush1.msra.mxu0 0.0
        %412 = vmatprep.subr.mxu0 0.0
        %413 = vmatpush1.msra.mxu0 0.0
        %414 = vmatprep.subr.mxu0 0.0
        %415 = vmatpush1.msra.mxu0 0.0
        %416 = vmatprep.subr.mxu0 0.0
        %417 = vmatpush1.msra.mxu0 0.0
        %418 = vmatprep.subr.mxu0 0.0
        %419 = vmatpush1.msra.mxu0 0.0
        %420 = vmatprep.subr.mxu0 0.0
        %421 = vmatpush1.msra.mxu0 0.0
        %422 = vmatprep.subr.mxu0 0.0
        %423 = vmatpush1.msra.mxu0 0.0
        %424 = vmatprep.subr.mxu0 0.0
        %425 = vmatpush1.msra.mxu0 0.0
        %426 = vmatprep.subr.mxu0 0.0
        %427 = vmatpush1.msra.mxu0 0.0
        %428 = vmatprep.subr.mxu0 0.0
        %429 = vmatpush1.msra.mxu0 0.0
        %430 = vmatprep.subr.mxu0 0.0
        %431 = vmatpush1.msra.mxu0 0.0
        %432 = vmatprep.subr.mxu0 0.0
        %433 = vmatpush1.msra.mxu0 %v400
        %434 = vmatprep.subr.mxu0 0.0
        %435 = vmatpush2.msra.mxu0 0.0
        %436 = vmatprep.subr.mxu0 0.0
        %437 = vmatpush2.msra.mxu0 0.0
        %438 = vmatprep.subr.mxu0 0.0
        %439 = vmatpush2.msra.mxu0 0.0
        %440 = vmatprep.subr.mxu0 0.0
        %441 = vmatpush2.msra.mxu0 0.0
        %442 = vmatprep.subr.mxu0 0.0
        %443 = vmatpush2.msra.mxu0 0.0
        %444 = vmatprep.subr.mxu0 0.0
        %445 = vmatpush2.msra.mxu0 0.0
        %446 = vmatprep.subr.mxu0 0.0
        %447 = vmatpush2.msra.mxu0 0.0
        %448 = vmatprep.subr.mxu0 0.0
        %449 = vmatpush2.msra.mxu0 0.0
        %450 = vmatprep.subr.mxu0 0.0
        %451 = vmatpush2.msra.mxu0 0.0
        %452 = vmatprep.subr.mxu0 0.0
        %453 = vmatpush2.msra.mxu0 0.0
        %454 = vmatprep.subr.mxu0 0.0
        %455 = vmatpush2.msra.mxu0 0.0
        %456 = vmatprep.subr.mxu0 0.0
        %457 = vmatpush2.msra.mxu0 0.0
        %458 = vmatprep.subr.mxu0 0.0
        %459 = vmatpush2.msra.mxu0 0.0
        %460 = vmatprep.subr.mxu0 0.0
        %461 = vmatpush2.msra.mxu0 0.0
        %462 = vmatprep.subr.mxu0 0.0
        %463 = vmatpush2.msra.mxu0 0.0
        %464 = vmatprep.subr.mxu0 0.0
        %465 = vmatpush2.msra.mxu0 0.0
        %466 = vmatprep.mubr.f32.mxu0 0.0
        %467 = vmatmul.mubr.f32.gmra.mxu0 %v391
        %v468 = vpop.f32.mrf.mxu0
        %v469 = vadd.f32 0.0, %v468
        %v470 = vpop.f32.mrf.mxu0
        %471 = vmatprep.mubr.f32.mxu0 0.0
        %472 = vmatmul.mubr.f32.gmra.mxu0 %v394
        %v473 = vpop.f32.mrf.mxu0
        %v474 = vadd.f32 0.0, %v473
        %v475 = vpop.f32.mrf.mxu0
        %476 = vmatprep.mubr.f32.mxu0 0.0
        %477 = vmatmul.mubr.f32.gmra.mxu0 %v397
        %v478 = vpop.f32.mrf.mxu0
        %v479 = vadd.f32 0.0, %v478
        %v480 = vpop.f32.mrf.mxu0
        %481 = vdwg.mxu0
        %v482 = vadd.f32 %v368, %v469
        %v483 = vadd.f32 %v373, %v474
        %v484 = vadd.f32 %v378, %v479
        %v485 = vld [vmem:[#allocation2] sm:$0x1]
        %v487 = vlaneseq
        %v488 = vshrl.u32 %v487, 7
        %v489 = vsub.s32 0, %v488
        %v490 = vrot.slane %v485, %v489
        %v492 = vadd.f32 %v482, %v490
        %v493 = vadd.f32 %v483, %v490
        %v494 = vadd.f32 %v484, %v490
        %v495 = vmax.f32 %v492, 0.0
        %v496 = vmax.f32 %v493, 0.0
        %v497 = vmax.f32 %v494, 0.0
        %v498 = vadd.s32 %v188, 8
        %v499 = vadd.s32 %v188, 16
        %vm500 = vcmp.lt.s32.totalorder %v188, 16
        %vm501 = vcmp.lt.s32.totalorder %v498, 16
        %vm502 = vcmp.lt.s32.totalorder %v499, 16
        %v503 = vsel %vm500, %v495, 0.0
        %v504 = vsel %vm501, %v496, 0.0
        %v505 = vsel %vm502, %v497, 0.0
        %v506 = vadd.f32 %v503, %v504
        %v507 = vadd.f32 %v506, %v505
        %v508 = vrot.slane %v507, 4
        %v509 = vadd.f32 %v507, %v508
        %v510 = vrot.slane %v509, 2
        %v511 = vadd.f32 %v509, %v510
        %v512 = vrot.slane %v511, 1
        %v513 = vadd.f32 %v511, %v512
        %v514 = vmul.f32 %v513, 0.0625
        %515 = vst [vmem:[%s179] sm:$0x1] %v514
        %p516 = scmp.lt.s32.totalorder %s15, 1
        %s517 = scalar_select %p516, %s15, 1
        %s518 = scalar_lea.vmem %s3, %s517
        // Predicated region
        $region37: #{moco_backbone_forward.2} parent=31 // pred_check
          %p519 = pneg %p101
        $region38: #{moco_backbone_forward.2} parent=31 // pred_check_branch
          %521 = sbr.rel (%p519) target = $region40
        $region39: #{moco_backbone_forward.2} parent=31 // pred_region
          _
        $region40: #{moco_backbone_forward.2} parent=31 // pred_fallthru
          _
      $region32: #{moco_backbone_forward.2} parent=5 // pred_fallthru
        _
      %p522 = scmp.le.s32.totalorder 2, %s10
      // Predicated region
      $region41: #{moco_backbone_forward.2} parent=5 // pred_check
        %p523 = pneg %p522
      $region42: #{moco_backbone_forward.2} parent=5 // pred_check_branch
        %525 = sbr.rel (%p523) target = $region44
      $region43: #{moco_backbone_forward.2} parent=5 // pred_region
        %s526 = ssub.s32 %s10, 2
        // Predicated region
        $region45: #{moco_backbone_forward.2} parent=43 // pred_check
          %p527 = pneg %p107
        $region46: #{moco_backbone_forward.2} parent=43 // pred_check_branch
          %529 = sbr.rel (%p527) target = $region48
        $region47: #{moco_backbone_forward.2} parent=43 // pred_region
          %p530 = scmp.lt.s32.totalorder %s16, 1
          %s531 = scalar_select %p530, %s16, 1
          %s532 = scalar_lea.vmem %s3, %s531
        $region48: #{moco_backbone_forward.2} parent=43 // pred_fallthru
          _
      $region44: #{moco_backbone_forward.2} parent=5 // pred_fallthru
        _
    $region6: #{moco_backbone_forward.2} parent=1 // loop_footer
      %s14 = sadd.s32 1, %s10
    $region7: #{moco_backbone_forward.2} parent=1 // loop_footer_branch
      %9 = sbr.rel target = $region3
    $region8: #{moco_backbone_forward.2} parent=1 // loop_exit
      _
    %533 = vsyncpa [#allocation3], 1
    %s534 = scalar_lea.sflag [#allocation3], 1
    %535 = vsyncpa %s534, 1

</llo_original>
